<compile_context>
chip_gen: v7x
topology: tpu7x:2x2x1
jax: 0.10.0
libtpu: 0.0.40
codegen_flags: <defaults>
</compile_context>

<pallas_src>
import functools

import jax
import jax.numpy as jnp
from jax import lax
from jax.experimental import pallas as pl
from jax.experimental.pallas import tpu as pltpu


def _round_up(x, m):
    return ((x + m - 1) // m) * m


def _quantize_to_f16_precision(x):
    """Round non-negative f32 values to float16 precision (RNE), staying in f32.

    Reproduces the f32 -> torch.HalfTensor -> f32 round-trip of the reference
    for values in the fp16 normal range (which covers this loss's step
    magnitudes), using only 32-bit integer ops so no fp16 types are needed
    inside the Mosaic kernel.
    # TODO(synk): fp16 subnormal / overflow(inf) edge cases are not reproduced.
    """
    bits = pltpu.bitcast(x, jnp.int32)
    lsb = (bits >> 13) & 1
    rounded = (bits + 0x0FFF + lsb) & jnp.int32(-(1 << 13))
    return pltpu.bitcast(rounded, jnp.float32)


def _depth_loss_kernel(bi_ref, bj_ref, p_col_ref, p_row_ref, step_ref,
                       out_ref, acc_ref, *, n, tm, tn, r_pad, inv_n2):
    t = pl.program_id(0)

    @pl.when(t == 0)
    def _init():
        acc_ref[...] = jnp.zeros_like(acc_ref)

    bi = bi_ref[t]                       # block-row index for this grid step
    bj = bj_ref[t]                       # block-col index for this grid step
    a = step_ref[0, 0]                   # acceptable_step (f32 scalar in SMEM)

    # Global row / col indices covered by this (tm, tn) tile.
    row = lax.broadcasted_iota(jnp.int32, (tm, tn), 0) + bi * tm
    col = lax.broadcasted_iota(jnp.int32, (tm, tn), 1) + bj * tn

    # steps[i, j] = |i - j| * acceptable_step, quantized to fp16 precision
    # (torch.HalfTensor); the 0.2 / 0.8 scalings use f32 op-math rounded back
    # to fp16, matching PyTorch half-kernel semantics.
    steps = _quantize_to_f16_precision(
        jnp.abs((row - col).astype(jnp.float32)) * a)
    s02 = _quantize_to_f16_precision(0.2 * steps)
    s08 = _quantize_to_f16_precision(0.8 * steps)

    d0 = p_col_ref[...] - p_row_ref[...]             # (tm,1)-(1,tn) -> (tm,tn)
    d1 = jnp.where(d0 >= 0.0, d0 - s02, d0)
    # |where(d1 >= 0, max(d1 - s08, 0), d1)| == max(d1 - s08, -d1, 0) because
    # s08 >= 0 — saves a compare/select pair on the hot path.
    abs_d2 = jnp.maximum(jnp.maximum(d1 - s08, -d1), 0.0)

    valid = row >= col                               # torch.tril (incl. diag)
    if r_pad > n:                                    # static: mask padded rows
        valid = jnp.logical_and(valid, row < n)
    contrib = jnp.where(valid, abs_d2, 0.0)

    # Lane-axis reduce per tile into a persistent column accumulator; the
    # cross-sublane reduce + 1/N^2 multiply happen once, on the final step.
    acc_ref[...] += jnp.sum(contrib, axis=-1, keepdims=True)

    @pl.when(t == pl.num_programs(0) - 1)
    def _finalize():
        out_ref[...] = jnp.sum(acc_ref[...], keepdims=True) * inv_n2


def depth_loss_v2(predictions, z_spacing, nth_slice, step,
                  *, max_tm=256, max_tn=512):
    """JAX/Pallas equivalent of DepthLossV2(step)(predictions, z_spacing, nth_slice)."""
    preds = predictions[:, 0].astype(jnp.float32)
    n = preds.shape[0]

    acceptable_step = (jnp.asarray(step, jnp.float32)
                       * jnp.asarray(z_spacing, jnp.float32)
                       * jnp.asarray(nth_slice, jnp.float32)).reshape(1, 1)
    # TODO(synk): .cuda() device transfer has no Pallas meaning; arrays already live on TPU.

    # Tile sizes: sublane axis (rows i) multiple of 8, lane axis (cols j)
    # multiple of 128; 256x512 keeps transients small enough for v5e/v7x VMEM.
    tm = min(max_tm, _round_up(n, 8))
    tn = min(max_tn, _round_up(n, 128))
    num_rb = -(-n // tm)
    num_cb = -(-n // tn)
    r_pad = num_rb * tm
    c_pad = num_cb * tn

    p_col = jnp.pad(preds, (0, r_pad - n)).reshape(r_pad, 1)
    p_row = jnp.pad(preds, (0, c_pad - n)).reshape(1, c_pad)

    # Enumerate only blocks that intersect the lower triangle (row >= col);
    # strictly-upper blocks are never visited by the grid.
    blocks = [(bi, bj)
              for bi in range(num_rb)
              for bj in range(num_cb)
              if bj * tn <= bi * tm + tm - 1]
    bi_arr = jnp.asarray([b[0] for b in blocks], dtype=jnp.int32)
    bj_arr = jnp.asarray([b[1] for b in blocks], dtype=jnp.int32)

    kernel = functools.partial(_depth_loss_kernel, n=n, tm=tm, tn=tn,
                               r_pad=r_pad, inv_n2=1.0 / float(n * n))

    out = pl.pallas_call(
        kernel,
        out_shape=jax.ShapeDtypeStruct((1, 1), jnp.float32),
        grid_spec=pltpu.PrefetchScalarGridSpec(
            num_scalar_prefetch=2,                       # bi_arr, bj_arr
            grid=(len(blocks),),
            in_specs=[
                pl.BlockSpec((tm, 1), lambda t, bi, bj: (bi[t], 0)),   # p_col
                pl.BlockSpec((1, tn), lambda t, bi, bj: (0, bj[t])),   # p_row
                pl.BlockSpec(memory_space=pltpu.MemorySpace.SMEM),     # step
            ],
            out_specs=pl.BlockSpec((1, 1), lambda t, bi, bj: (0, 0)),  # loss
            scratch_shapes=[pltpu.VMEM((tm, 1), jnp.float32)],         # acc
        ),
        compiler_params=pltpu.CompilerParams(
            dimension_semantics=("arbitrary",)),         # reduction grid axis
    )(bi_arr, bj_arr, p_col, p_row, acceptable_step)

    return out[0, 0]


def _reference_jax(predictions, z_spacing, nth_slice, step):
    """Pure-JAX reference mirroring the PyTorch forward, for a sanity check."""
    acceptable_step = (jnp.float32(step) * jnp.float32(z_spacing)
                       * jnp.float32(nth_slice))
    p = predictions[:, 0].astype(jnp.float32)
    n = p.shape[0]
    d = p[:, None] - p[None, :]
    idx = jnp.arange(n)
    steps = (jnp.abs(idx[:, None] - idx[None, :]).astype(jnp.float32)
             * acceptable_step).astype(jnp.float16)
    s02 = (0.2 * steps.astype(jnp.float32)).astype(jnp.float16).astype(jnp.float32)
    s08 = (0.8 * steps.astype(jnp.float32)).astype(jnp.float16).astype(jnp.float32)
    d = jnp.where(d >= 0.0, d - s02, d)
    d = jnp.where(d >= 0.0, jnp.maximum(d - s08, 0.0), d)
    return jnp.sum(jnp.abs(jnp.tril(d))) / (n * n)


if __name__ == "__main__":
    step = 0.5          # DepthLossV2(step)
    z_spacing = 1.5
    nth_slice = 2.0

    # Small case (single block): N=16 slices, as produced by the MIL encoder head.
    key = jax.random.PRNGKey(0)
    predictions = jax.random.normal(key, (16, 1), dtype=jnp.float32) * 5.0
    loss = jax.block_until_ready(depth_loss_v2(predictions, z_spacing, nth_slice, step))
    ref = jax.block_until_ready(_reference_jax(predictions, z_spacing, nth_slice, step))
    assert jnp.allclose(loss, ref, rtol=1e-5, atol=1e-5), (loss, ref)

    # Larger case exercising the tiled multi-block grid, prefetch maps and
    # row-padding mask (looser rtol only for summation-order differences).
    key2 = jax.random.PRNGKey(1)
    predictions2 = jax.random.normal(key2, (300, 1), dtype=jnp.float32) * 5.0
    loss2 = jax.block_until_ready(depth_loss_v2(predictions2, z_spacing, nth_slice, step))
    ref2 = jax.block_until_ready(_reference_jax(predictions2, z_spacing, nth_slice, step))
    assert jnp.allclose(loss2, ref2, rtol=1e-4, atol=1e-5), (loss2, ref2)

    print("KERNEL_OK")
</pallas_src>

<mosaic_0001>
module attributes {stable_mosaic.version = 11 : i64} {
  func.func @_depth_loss_kernel(%arg0: i32, %arg1: memref<1xi32, #tpu.memory_space<smem>>, %arg2: memref<1xi32, #tpu.memory_space<smem>>, %arg3: memref<16x1xf32, #tpu.memory_space<vmem>>, %arg4: memref<1x128xf32, #tpu.memory_space<vmem>>, %arg5: memref<1x1xf32, #tpu.memory_space<smem>>, %arg6: memref<1x1xf32, #tpu.memory_space<vmem>>, %arg7: memref<16x1xf32, #tpu.memory_space<vmem>>) attributes {dimension_semantics = [#tpu.dimension_semantics<arbitrary>], iteration_bounds = array<i64: 1>, scalar_prefetch = 2 : i64, scratch_operands = 1 : i64, tpu.core_type = #tpu.core_type<tc>, window_params = [{transform_indices = @transform_0, window_bounds = array<i64: 16, 1>}, {transform_indices = @transform_1, window_bounds = array<i64: 1, 128>}, {transform_indices = @transform_2, window_bounds = array<i64: 1, 1>}, {pipeline_mode = #tpu.pipeline_mode<synchronous>, transform_indices = @transform_3, window_bounds = array<i64: 1, 1>}]} {
    %c0_i32 = arith.constant 0 : i32
    %0 = arith.cmpi eq, %arg0, %c0_i32 : i32
    %1 = arith.extui %0 : i1 to i32
    %c0_i32_0 = arith.constant 0 : i32
    %2 = arith.cmpi ne, %1, %c0_i32_0 : i32
    scf.if %2 {
      %cst_26 = arith.constant 0.000000e+00 : f32
      %84 = vector.broadcast %cst_26 : f32 to vector<16x1xf32>
      %c0_27 = arith.constant 0 : index
      %c0_28 = arith.constant 0 : index
      %85 = vector.load %arg7[%c0_27, %c0_28] : memref<16x1xf32, #tpu.memory_space<vmem>>, vector<16x1xf32>
      tpu.vector_store %arg7[%c0_27, %c0_28], %84 {strides = array<i32>} : memref<16x1xf32, #tpu.memory_space<vmem>>, vector<16x1xf32>,
    } else {
    }
    %3 = arith.index_cast %arg0 : i32 to index
    %4 = memref.load %arg1[%3] : memref<1xi32, #tpu.memory_space<smem>>
    %5 = arith.index_cast %arg0 : i32 to index
    %6 = memref.load %arg2[%5] : memref<1xi32, #tpu.memory_space<smem>>
    %c0 = arith.constant 0 : index
    %c0_1 = arith.constant 0 : index
    %7 = memref.load %arg5[%c0, %c0_1] : memref<1x1xf32, #tpu.memory_space<smem>>
    %8 = tpu.iota {dimensions = array<i32: 0>} : vector<16x128xi32>
    %c16_i32 = arith.constant 16 : i32
    %9 = arith.muli %4, %c16_i32 : i32
    %10 = vector.broadcast %9 : i32 to vector<16x128xi32>
    %11 = arith.addi %8, %10 : vector<16x128xi32>
    %12 = tpu.iota {dimensions = array<i32: 1>} : vector<16x128xi32>
    %c128_i32 = arith.constant 128 : i32
    %13 = arith.muli %6, %c128_i32 : i32
    %14 = vector.broadcast %13 : i32 to vector<16x128xi32>
    %15 = arith.addi %12, %14 : vector<16x128xi32>
    %16 = arith.subi %11, %15 : vector<16x128xi32>
    %17 = arith.sitofp %16 : vector<16x128xi32> to vector<16x128xf32>
    %18 = math.absf %17 : vector<16x128xf32>
    %19 = vector.broadcast %7 : f32 to vector<16x128xf32>
    %20 = arith.mulf %18, %19 : vector<16x128xf32>
    %21 = tpu.bitcast %20 : vector<16x128xf32> -> vector<16x128xi32>
    %c13_i32 = arith.constant 13 : i32
    %22 = vector.broadcast %c13_i32 : i32 to vector<16x128xi32>
    %23 = arith.shrsi %21, %22 : vector<16x128xi32>
    %c1_i32 = arith.constant 1 : i32
    %24 = vector.broadcast %c1_i32 : i32 to vector<16x128xi32>
    %25 = arith.andi %23, %24 : vector<16x128xi32>
    %c4095_i32 = arith.constant 4095 : i32
    %26 = vector.broadcast %c4095_i32 : i32 to vector<16x128xi32>
    %27 = arith.addi %21, %26 : vector<16x128xi32>
    %28 = arith.addi %27, %25 : vector<16x128xi32>
    %c-8192_i32 = arith.constant -8192 : i32
    %29 = vector.broadcast %c-8192_i32 : i32 to vector<16x128xi32>
    %30 = arith.andi %28, %29 : vector<16x128xi32>
    %31 = tpu.bitcast %30 : vector<16x128xi32> -> vector<16x128xf32>
    %cst = arith.constant 2.000000e-01 : f32
    %32 = vector.broadcast %cst : f32 to vector<16x128xf32>
    %33 = arith.mulf %32, %31 : vector<16x128xf32>
    %34 = tpu.bitcast %33 : vector<16x128xf32> -> vector<16x128xi32>
    %c13_i32_2 = arith.constant 13 : i32
    %35 = vector.broadcast %c13_i32_2 : i32 to vector<16x128xi32>
    %36 = arith.shrsi %34, %35 : vector<16x128xi32>
    %c1_i32_3 = arith.constant 1 : i32
    %37 = vector.broadcast %c1_i32_3 : i32 to vector<16x128xi32>
    %38 = arith.andi %36, %37 : vector<16x128xi32>
    %c4095_i32_4 = arith.constant 4095 : i32
    %39 = vector.broadcast %c4095_i32_4 : i32 to vector<16x128xi32>
    %40 = arith.addi %34, %39 : vector<16x128xi32>
    %41 = arith.addi %40, %38 : vector<16x128xi32>
    %c-8192_i32_5 = arith.constant -8192 : i32
    %42 = vector.broadcast %c-8192_i32_5 : i32 to vector<16x128xi32>
    %43 = arith.andi %41, %42 : vector<16x128xi32>
    %44 = tpu.bitcast %43 : vector<16x128xi32> -> vector<16x128xf32>
    %cst_6 = arith.constant 8.000000e-01 : f32
    %45 = vector.broadcast %cst_6 : f32 to vector<16x128xf32>
    %46 = arith.mulf %45, %31 : vector<16x128xf32>
    %47 = tpu.bitcast %46 : vector<16x128xf32> -> vector<16x128xi32>
    %c13_i32_7 = arith.constant 13 : i32
    %48 = vector.broadcast %c13_i32_7 : i32 to vector<16x128xi32>
    %49 = arith.shrsi %47, %48 : vector<16x128xi32>
    %c1_i32_8 = arith.constant 1 : i32
    %50 = vector.broadcast %c1_i32_8 : i32 to vector<16x128xi32>
    %51 = arith.andi %49, %50 : vector<16x128xi32>
    %c4095_i32_9 = arith.constant 4095 : i32
    %52 = vector.broadcast %c4095_i32_9 : i32 to vector<16x128xi32>
    %53 = arith.addi %47, %52 : vector<16x128xi32>
    %54 = arith.addi %53, %51 : vector<16x128xi32>
    %c-8192_i32_10 = arith.constant -8192 : i32
    %55 = vector.broadcast %c-8192_i32_10 : i32 to vector<16x128xi32>
    %56 = arith.andi %54, %55 : vector<16x128xi32>
    %57 = tpu.bitcast %56 : vector<16x128xi32> -> vector<16x128xf32>
    %c0_11 = arith.constant 0 : index
    %c0_12 = arith.constant 0 : index
    %58 = vector.load %arg3[%c0_11, %c0_12] : memref<16x1xf32, #tpu.memory_space<vmem>>, vector<16x1xf32>
    %c0_13 = arith.constant 0 : index
    %c0_14 = arith.constant 0 : index
    %59 = vector.load %arg4[%c0_13, %c0_14] : memref<1x128xf32, #tpu.memory_space<vmem>>, vector<1x128xf32>
    %60 = vector.broadcast %58 : vector<16x1xf32> to vector<16x128xf32>
    %61 = vector.broadcast %59 : vector<1x128xf32> to vector<16x128xf32>
    %62 = arith.subf %60, %61 : vector<16x128xf32>
    %cst_15 = arith.constant 0.000000e+00 : f32
    %63 = vector.broadcast %cst_15 : f32 to vector<16x128xf32>
    %64 = arith.cmpf oge, %62, %63 : vector<16x128xf32>
    %65 = arith.subf %62, %44 : vector<16x128xf32>
    %66 = arith.select %64, %65, %62 : vector<16x128xi1>, vector<16x128xf32>
    %67 = arith.subf %66, %57 : vector<16x128xf32>
    %cst_16 = arith.constant 0.000000e+00 : f32
    %68 = vector.broadcast %cst_16 : f32 to vector<16x128xf32>
    %69 = arith.subf %68, %66 : vector<16x128xf32>
    %70 = arith.maximumf %67, %69 : vector<16x128xf32>
    %cst_17 = arith.constant 0.000000e+00 : f32
    %71 = vector.broadcast %cst_17 : f32 to vector<16x128xf32>
    %72 = arith.maximumf %70, %71 : vector<16x128xf32>
    %73 = arith.cmpi sge, %11, %15 : vector<16x128xi32>
    %cst_18 = arith.constant 0.000000e+00 : f32
    %74 = vector.broadcast %cst_18 : f32 to vector<16x128xf32>
    %75 = arith.select %73, %72, %74 : vector<16x128xi1>, vector<16x128xf32>
    %c0_19 = arith.constant 0 : index
    %c0_20 = arith.constant 0 : index
    %76 = vector.load %arg7[%c0_19, %c0_20] : memref<16x1xf32, #tpu.memory_space<vmem>>, vector<16x1xf32>
    %cst_21 = arith.constant dense<0.000000e+00> : vector<16xf32>
    %77 = vector.multi_reduction <add>, %75, %cst_21 [1] : vector<16x128xf32> to vector<16xf32>
    %78 = vector.shape_cast %77 : vector<16xf32> to vector<16x1xf32>
    %79 = arith.addf %76, %78 : vector<16x1xf32>
    %c0_22 = arith.constant 0 : index
    %c0_23 = arith.constant 0 : index
    %80 = vector.load %arg7[%c0_22, %c0_23] : memref<16x1xf32, #tpu.memory_space<vmem>>, vector<16x1xf32>
    tpu.vector_store %arg7[%c0_22, %c0_23], %79 {strides = array<i32>} : memref<16x1xf32, #tpu.memory_space<vmem>>, vector<16x1xf32>,
    %c0_i32_24 = arith.constant 0 : i32
    %81 = arith.cmpi eq, %arg0, %c0_i32_24 : i32
    %82 = arith.extui %81 : i1 to i32
    %c0_i32_25 = arith.constant 0 : i32
    %83 = arith.cmpi ne, %82, %c0_i32_25 : i32
    scf.if %83 {
      %c0_26 = arith.constant 0 : index
      %c0_27 = arith.constant 0 : index
      %84 = vector.load %arg7[%c0_26, %c0_27] : memref<16x1xf32, #tpu.memory_space<vmem>>, vector<16x1xf32>
      %85 = vector.shape_cast %84 : vector<16x1xf32> to vector<1x16x1xf32>
      %cst_28 = arith.constant dense<0.000000e+00> : vector<1xf32>
      %86 = vector.multi_reduction <add>, %85, %cst_28 [1, 2] : vector<1x16x1xf32> to vector<1xf32>
      %87 = vector.shape_cast %86 : vector<1xf32> to vector<1x1x1xf32>
      %88 = vector.extract %87[0, 0, 0] : f32 from vector<1x1x1xf32>
      %89 = vector.broadcast %88 : f32 to vector<1x1xf32>
      %cst_29 = arith.constant 3.906250e-03 : f32
      %90 = vector.broadcast %cst_29 : f32 to vector<1x1xf32>
      %91 = arith.mulf %89, %90 : vector<1x1xf32>
      %c0_30 = arith.constant 0 : index
      %c0_31 = arith.constant 0 : index
      %92 = vector.load %arg6[%c0_30, %c0_31] : memref<1x1xf32, #tpu.memory_space<vmem>>, vector<1x1xf32>
      tpu.vector_store %arg6[%c0_30, %c0_31], %91 {strides = array<i32>} : memref<1x1xf32, #tpu.memory_space<vmem>>, vector<1x1xf32>,
    } else {
    }
    return
  }
  func.func @transform_0(%arg0: i32, %arg1: memref<1xi32, #tpu.memory_space<smem>>, %arg2: memref<1xi32, #tpu.memory_space<smem>>) -> (i32, i32) {
    %0 = arith.index_cast %arg0 : i32 to index
    %1 = memref.load %arg1[%0] : memref<1xi32, #tpu.memory_space<smem>>
    %c0_i32 = arith.constant 0 : i32
    %c0_i32_0 = arith.constant 0 : i32
    return %1, %c0_i32 : i32, i32
  }
  func.func @transform_1(%arg0: i32, %arg1: memref<1xi32, #tpu.memory_space<smem>>, %arg2: memref<1xi32, #tpu.memory_space<smem>>) -> (i32, i32) {
    %0 = arith.index_cast %arg0 : i32 to index
    %1 = memref.load %arg2[%0] : memref<1xi32, #tpu.memory_space<smem>>
    %c0_i32 = arith.constant 0 : i32
    %c0_i32_0 = arith.constant 0 : i32
    return %c0_i32, %1 : i32, i32
  }
  func.func @transform_2(%arg0: i32, %arg1: memref<1xi32, #tpu.memory_space<smem>>, %arg2: memref<1xi32, #tpu.memory_space<smem>>) -> (i32, i32) {
    %c0_i32 = arith.constant 0 : i32
    %c0_i32_0 = arith.constant 0 : i32
    %c0_i32_1 = arith.constant 0 : i32
    return %c0_i32, %c0_i32_0 : i32, i32
  }
  func.func @transform_3(%arg0: i32, %arg1: memref<1xi32, #tpu.memory_space<smem>>, %arg2: memref<1xi32, #tpu.memory_space<smem>>) -> (i32, i32) {
    %c0_i32 = arith.constant 0 : i32
    %c0_i32_0 = arith.constant 0 : i32
    %c0_i32_1 = arith.constant 0 : i32
    return %c0_i32, %c0_i32_0 : i32, i32
  }
}

</mosaic_0001>

<llo_original>
// kernel: tpu_custom_call.1
$region0: #{tpu_custom_call.1}
  #allocation0 [shape = 'u32[]', space=smem, size = 0x4, offset = 0x4, fixed_abs, tag = 'smem constant byte address 0x4 - core index']
  #allocation1 [shape = 'u32[144,128]{1,0:T(1,128)}', space=vmem, size = 0x12000, scoped, tag = 'internal scratch']
  #allocation2 [shape = 'f32[16,1]{1,0:T(8,128)}', space=vmem, size = 0x2000, scoped, tag = 'scratch operand']
  #allocation3 [shape = 's32[1]{0}', space=sflag, size = 0x4, scoped, tag = 'scoped memory for tpu_custom_call.1']
  #allocation4 [shape = 's32[1]{0:T(128)S(6)}', space=smem, size = 0x200, scoped, tag = 'prefetched SMEM operand 0']
  #allocation5 [shape = 's32[1]{0:T(128)S(6)}', space=smem, size = 0x200, scoped, tag = 'prefetched SMEM operand 1']
  #allocation6 [shape = 'f32[1,1]{1,0:T(1,128)S(6)}', space=smem, size = 0x200, scoped, tag = 'scoped memory for tpu_custom_call.1']
  %s0 = inlined_call_operand.<no memory space> [shape: s32[1], index: 0, kind: input, shape index: {}]
  %s1 = inlined_call_operand.<no memory space> [shape: s32[1], index: 1, kind: input, shape index: {}]
  %s2 = inlined_call_operand.vmem [shape: f32[16,1], index: 2, kind: input, shape index: {}]
  %s3 = inlined_call_operand.vmem [shape: f32[1,128], index: 3, kind: input, shape index: {}]
  %s4 = inlined_call_operand.<no memory space> [shape: f32[1,1], index: 4, kind: input, shape index: {}]
  %s5 = inlined_call_operand.hbm [shape: f32[1,1], index: 5, kind: output, shape index: {}]
  %s6 = sld [smem:[#allocation0]]
  $region30: #{tpu_custom_call.1} parent=0
    _
  %s8 = ssub.s32 1, %s6
  %s9 = scalar_select 0, %s8, %s6
  %10 = sst [smem:[#allocation4]] %s0
  %11 = sst [smem:[#allocation5]] %s1
  %12 = sst [smem:[#allocation6]] %s4
  $region1: #{tpu_custom_call.1} parent=0
    #allocation7 [shape = 'u8[512]{0}', space=vmem, size = 0x400, scoped, tag = 'output window, operand 0, single buffered']
    #allocation8 [shape = 's32[1]{0}', space=sflag, size = 0x4, scoped, tag = 'scoped memory for tpu_custom_call.1']
    %13 = vsyncpa [#allocation8], 0
    // Predicated region
    $region2: #{tpu_custom_call.1} parent=1 // pred_check
      _
    $region3: #{tpu_custom_call.1} parent=1 // pred_check_branch
      %15 = sbr.rel (0) target = $region5
    $region4: #{tpu_custom_call.1} parent=1 // pred_region
      %s16 = sld [smem:[#allocation4]]
      %s17 = smul.u32 2, %s16
      %p18 = scmp.lt.s32.totalorder %s17, 1
      %s19 = scalar_select %p18, %s17, 1
      %s20 = smul.addr %s19, 8
      %s21 = scalar_lea.vmem %s2, %s20
      %s22 = sld [smem:[#allocation4]]
      %s23 = smul.u32 2, %s22
    $region5: #{tpu_custom_call.1} parent=1 // pred_fallthru
      _
    // Predicated region
    $region6: #{tpu_custom_call.1} parent=1 // pred_check
      _
    $region7: #{tpu_custom_call.1} parent=1 // pred_check_branch
      %25 = sbr.rel (0) target = $region9
    $region8: #{tpu_custom_call.1} parent=1 // pred_region
      %s26 = sld [smem:[#allocation5]]
      %p27 = scmp.lt.s32.totalorder %s26, 0
      %s28 = scalar_select %p27, %s26, 0
      %s29 = scalar_lea.vmem %s3, %s28
      %s30 = sld [smem:[#allocation5]]
    $region9: #{tpu_custom_call.1} parent=1 // pred_fallthru
      _
    // Predicated region
    $region10: #{tpu_custom_call.1} parent=1 // pred_check
      _
    $region11: #{tpu_custom_call.1} parent=1 // pred_check_branch
      %32 = sbr.rel (0) target = $region13
    $region12: #{tpu_custom_call.1} parent=1 // pred_region
      _
    $region13: #{tpu_custom_call.1} parent=1 // pred_fallthru
      _
    %s33 = sld [smem:[#allocation4]]
    %s34 = smul.u32 2, %s33
    %p35 = scmp.lt.s32.totalorder %s34, 1
    %s36 = scalar_select %p35, %s34, 1
    %s37 = smul.addr %s36, 8
    %s38 = scalar_lea.vmem %s2, %s37
    %s39 = sld [smem:[#allocation5]]
    %p40 = scmp.lt.s32.totalorder %s39, 0
    %s41 = scalar_select %p40, %s39, 0
    %s42 = scalar_lea.vmem %s3, %s41
    %s43 = sld [smem:[#allocation4]]
    %s44 = smul.u32 2, %s43
    %p45 = scmp.lt.s32.totalorder %s44, 1
    %s46 = scalar_select %p45, %s44, 1
    %s47 = smul.addr %s46, 8
    %s48 = scalar_lea.vmem %s2, %s47
    %s49 = sld [smem:[#allocation4]]
    %s50 = smul.u32 2, %s49
    %s51 = sld [smem:[#allocation5]]
    %p52 = scmp.lt.s32.totalorder %s51, 0
    %s53 = scalar_select %p52, %s51, 0
    %s54 = scalar_lea.vmem %s3, %s53
    %s55 = sld [smem:[#allocation5]]
    %p56 = scmp.eq.s32.totalorder 0, 0
    // Predicated region
    $region14: #{tpu_custom_call.1} parent=1 // pred_check
      %p57 = pneg %p56
    $region15: #{tpu_custom_call.1} parent=1 // pred_check_branch
      %59 = sbr.rel (%p57) target = $region17
    $region16: #{tpu_custom_call.1} parent=1 // pred_region
      %vm60 = vcmask 7168
      %61 = vst.msk [vmem:[#allocation2] sm:$0xff] %vm60, 0.0
      %62 = vst.msk [vmem:[#allocation2 + $0x8] sm:$0xff] %vm60, 0.0
    $region17: #{tpu_custom_call.1} parent=1 // pred_fallthru
      _
    %s63 = sld [smem:[#allocation4]]
    %s64 = sld [smem:[#allocation5]]
    %s65 = sld [smem:[#allocation6]]
    %v66 = vlaneseq
    %v67 = vshrl.u32 %v66, 7
    %v68 = vadd.s32 %v67, 8
    %s69 = smul.u32 %s63, 16
    %v70 = vstv %s69
    %v71 = vadd.s32 %v67, %v70
    %v72 = vadd.s32 %v68, %v70
    %v73 = vlaneseq
    %v74 = vand.u32 %v73, 127
    %s75 = smul.u32 %s64, 128
    %v76 = vstv %s75
    %v77 = vadd.s32 %v74, %v76
    %v78 = vsub.s32 %v71, %v77
    %v79 = vsub.s32 %v72, %v77
    %v80 = vcvt.s32.f32 %v78
    %v81 = vcvt.s32.f32 %v79
    %v82 = vand.u32 2147483647, %v80
    %v83 = vand.u32 2147483647, %v81
    %v84 = vstv %s65
    %v85 = vmul.f32 %v82, %v84
    %v86 = vmul.f32 %v83, %v84
    %v89 = vshra.s32 %v85, 13
    %v90 = vshra.s32 %v86, 13
    %v91 = vand.u32 %v89, 1
    %v92 = vand.u32 %v90, 1
    %v93 = vadd.s32 %v85, 4095
    %v94 = vadd.s32 %v86, 4095
    %v95 = vadd.s32 %v93, %v91
    %v96 = vadd.s32 %v94, %v92
    %v97 = vand.u32 %v95, 4294959104
    %v98 = vand.u32 %v96, 4294959104
    %v101 = vmul.f32 %v97, 0.2
    %v102 = vmul.f32 %v98, 0.2
    %v105 = vshra.s32 %v101, 13
    %v106 = vshra.s32 %v102, 13
    %v107 = vand.u32 %v105, 1
    %v108 = vand.u32 %v106, 1
    %v109 = vadd.s32 %v101, 4095
    %v110 = vadd.s32 %v102, 4095
    %v111 = vadd.s32 %v109, %v107
    %v112 = vadd.s32 %v110, %v108
    %v113 = vand.u32 %v111, 4294959104
    %v114 = vand.u32 %v112, 4294959104
    %v117 = vmul.f32 %v97, 0.8
    %v118 = vmul.f32 %v98, 0.8
    %v121 = vshra.s32 %v117, 13
    %v122 = vshra.s32 %v118, 13
    %v123 = vand.u32 %v121, 1
    %v124 = vand.u32 %v122, 1
    %v125 = vadd.s32 %v117, 4095
    %v126 = vadd.s32 %v118, 4095
    %v127 = vadd.s32 %v125, %v123
    %v128 = vadd.s32 %v126, %v124
    %v129 = vand.u32 %v127, 4294959104
    %v130 = vand.u32 %v128, 4294959104
    %v133 = vld [vmem:[%s48] sm:$0xff]
    %v134 = vld [vmem:[%s48 + $0x8] sm:$0xff]
    %v135 = vld [vmem:[%s54] sm:$0x1]
    %137 = vset.pattern.permute.xlu0 0
    %138 = vperm.xlu0 %137, %v133
    %v139 = vpop.permute.xlu0 %138
    %142 = vset.pattern.permute.xlu0 0
    %143 = vperm.xlu0 %142, %v134
    %v144 = vpop.permute.xlu0 %143
    %v147 = vlaneseq
    %v148 = vshrl.u32 %v147, 7
    %v149 = vsub.s32 0, %v148
    %v150 = vrot.slane %v135, %v149
    %v152 = vsub.f32 %v139, %v150
    %v153 = vsub.f32 %v144, %v150
    %vm154 = vcmp.ge.f32.partialorder %v152, 0.0
    %vm155 = vcmp.ge.f32.partialorder %v153, 0.0
    %v156 = vsub.f32 %v152, %v113
    %v157 = vsub.f32 %v153, %v114
    %v158 = vsel %vm154, %v156, %v152
    %v159 = vsel %vm155, %v157, %v153
    %v160 = vsub.f32 %v158, %v129
    %v161 = vsub.f32 %v159, %v130
    %v162 = vsub.f32 0.0, %v158
    %v163 = vsub.f32 0.0, %v159
    %v164 = vmax.f32 %v160, %v162
    %v165 = vmax.f32 %v161, %v163
    %v166 = vmax.f32 %v164, 0.0
    %v167 = vmax.f32 %v165, 0.0
    %vm168 = vcmp.ge.s32.totalorder %v71, %v77
    %vm169 = vcmp.ge.s32.totalorder %v72, %v77
    %v170 = vsel %vm168, %v166, 0.0
    %v171 = vsel %vm169, %v167, 0.0
    %v172 = vld [vmem:[#allocation2] sm:$0xff]
    %v173 = vld [vmem:[#allocation2 + $0x8] sm:$0xff]
    %174 = vadd.xlane.f32.xlu0 %v170
    %v175 = vpop.xlane.xlu0 %174
    %176 = vadd.xlane.f32.xlu0 %v171
    %v177 = vpop.xlane.xlu0 %176
    %v178 = vadd.f32 %v172, %v175
    %v179 = vadd.f32 %v173, %v177
    %vm180 = vcmask 7168
    %181 = vst.msk [vmem:[#allocation2] sm:$0xff] %vm180, %v178
    %182 = vst.msk [vmem:[#allocation2 + $0x8] sm:$0xff] %vm180, %v179
    // Predicated region
    $region18: #{tpu_custom_call.1} parent=1 // pred_check
      %p183 = pneg %p56
    $region19: #{tpu_custom_call.1} parent=1 // pred_check_branch
      %185 = sbr.rel (%p183) target = $region21
    $region20: #{tpu_custom_call.1} parent=1 // pred_region
      %v186 = vld [vmem:[#allocation2] sm:$0xff]
      %v187 = vld [vmem:[#allocation2 + $0x8] sm:$0xff]
      %v188 = vsel %vm180, %v186, 0.0
      %v189 = vsel %vm180, %v187, 0.0
      %v190 = vadd.f32 %v188, %v189
      %191 = vadd.xlane.f32.xlu0 %v190
      %v192 = vpop.xlane.xlu0 %191
      %v193 = vrot.slane %v192, 4
      %v194 = vadd.f32 %v192, %v193
      %v195 = vrot.slane %v194, 2
      %v196 = vadd.f32 %v194, %v195
      %v197 = vrot.slane %v196, 1
      %v198 = vadd.f32 %v196, %v197
      %s199 = vtos %v198
      %v200 = vstv %s199
      %v201 = vmul.f32 %v200, 0.00390625
      %vm202 = vcmask 0
      %203 = vst.msk [vmem:[#allocation7] sm:$0x1] %vm202, %v201
    $region21: #{tpu_custom_call.1} parent=1 // pred_fallthru
      _
    // Predicated region
    $region22: #{tpu_custom_call.1} parent=1 // pred_check
      _
    $region23: #{tpu_custom_call.1} parent=1 // pred_check_branch
      %205 = sbr.rel (0) target = $region25
    $region24: #{tpu_custom_call.1} parent=1 // pred_region
      %s207 = ssub.s32 16, 16
      %208 = vsyncadd [#allocation8], %s207
      %s210 = sshll.u32 [#allocation7], 4
      %s211 = int_to_ptr.vmem [resolvable:$true] %s210
      %213 = dma.vmem_to_hbm [thread:$0]  %s211, 16, %s5, [#allocation8]
    $region25: #{tpu_custom_call.1} parent=1 // pred_fallthru
      _
    // Predicated region
    $region26: #{tpu_custom_call.1} parent=1 // pred_check
      _
    $region27: #{tpu_custom_call.1} parent=1 // pred_check_branch
      %215 = sbr.rel (0) target = $region29
    $region28: #{tpu_custom_call.1} parent=1 // pred_region
      %216 = dma.done [#allocation8], 16
    $region29: #{tpu_custom_call.1} parent=1 // pred_fallthru
      _
    %217 = vsyncpa [#allocation8], 1

</llo_original>
